<compile_context>
chip_gen: v5e
topology: v5e:2x2
jax: 0.10.0
libtpu: 0.0.40
codegen_flags: <defaults>
</compile_context>

<pallas_src>
import jax
import jax.numpy as jnp
from jax.experimental import pallas as pl
from jax.experimental.pallas import tpu as pltpu


def _round_up(x, m):
    return ((x + m - 1) // m) * m


def _integral_kernel(x_ref, out_ref):
    # x_ref:   (TM, K) block of distribution rows, K = reg_max + 1
    # out_ref: (TM, 1) expected value per row
    x = x_ref[...].astype(jnp.float32)
    k = x.shape[-1]
    # project = [0, 1, ..., reg_max], built in-kernel (values are exact integers).
    proj = jax.lax.broadcasted_iota(jnp.int32, (1, k), 1).astype(jnp.float32)
    # Numerically stable softmax expectation with a single divide per row:
    #   y = sum(e * proj) / sum(e),  e = exp(x - max(x))
    m = jnp.max(x, axis=-1, keepdims=True)
    e = jnp.exp(x - m)
    num = jnp.sum(e * proj, axis=-1, keepdims=True)
    den = jnp.sum(e, axis=-1, keepdims=True)
    out_ref[...] = (num / den).astype(out_ref.dtype)


def integral_pallas(x, reg_max=16, row_tile=2048):
    """x: (N, 4*(reg_max+1)) -> (N, 4)."""
    N = x.shape[0]
    K = reg_max + 1
    assert x.shape[1] == 4 * K, f"expected last dim {4 * K}, got {x.shape[1]}"
    M = 4 * N  # number of distribution rows

    # Tile sizing: large to amortize per-step overhead, but keep >=4 grid steps
    # (megacore on v7x) and respect the (8, 128) sublane constraint.
    tile = min(row_tile, _round_up(pl.cdiv(M, 4), 8))
    tile = max(8, _round_up(tile, 8))

    num_tiles = pl.cdiv(M, tile)
    m_pad = num_tiles * tile

    x_rows = x.reshape(M, K)
    if m_pad != M:
        # Padded rows see all-zero logits -> uniform softmax -> finite result,
        # and are sliced off below.
        x_rows = jnp.pad(x_rows, ((0, m_pad - M), (0, 0)))

    out_rows = pl.pallas_call(
        _integral_kernel,
        out_shape=jax.ShapeDtypeStruct((m_pad, 1), x.dtype),
        grid=(num_tiles,),
        in_specs=[
            pl.BlockSpec((tile, K), lambda i: (i, 0)),
        ],
        out_specs=pl.BlockSpec((tile, 1), lambda i: (i, 0)),
        compiler_params=pltpu.CompilerParams(
            dimension_semantics=("parallel",),
        ),
    )(x_rows)

    # TODO(synk): a K-on-sublane (transposed) layout / lane-dense output slab would
    # recover the 17/128 lane efficiency, but needs the transpose fused upstream;
    # not applied here to keep a single HBM pass and guaranteed lowering.
    return out_rows[:M].reshape(N, 4)


def integral_ref(x, reg_max=16):
    """Pure-JAX reference mirroring the PyTorch forward."""
    K = reg_max + 1
    p = jax.nn.softmax(x.reshape(-1, K).astype(jnp.float32), axis=1)
    project = jnp.linspace(0.0, float(reg_max), K, dtype=jnp.float32)
    return (p @ project).reshape(-1, 4).astype(x.dtype)


if __name__ == "__main__":
    reg_max = 16
    key = jax.random.PRNGKey(0)

    # Case 1: small, even number of boxes.
    N = 8
    x = jax.random.normal(key, (N, 4 * (reg_max + 1)), dtype=jnp.float32)
    out = jax.block_until_ready(integral_pallas(x, reg_max=reg_max))
    ref = integral_ref(x, reg_max=reg_max)
    assert out.shape == (N, 4), out.shape
    assert jnp.allclose(out, ref, atol=1e-5, rtol=1e-5)

    # Case 2: odd N (exercises the cdiv + padding remainder path).
    N2 = 5
    x2 = jax.random.normal(jax.random.PRNGKey(1), (N2, 4 * (reg_max + 1)),
                           dtype=jnp.float32)
    out2 = jax.block_until_ready(integral_pallas(x2, reg_max=reg_max))
    ref2 = integral_ref(x2, reg_max=reg_max)
    assert out2.shape == (N2, 4), out2.shape
    assert jnp.allclose(out2, ref2, atol=1e-5, rtol=1e-5)

    print("KERNEL_OK")
</pallas_src>

<mosaic_0001>
module attributes {stable_mosaic.version = 11 : i64} {
  func.func @_integral_kernel(%arg0: i32, %arg1: memref<8x17xf32, #tpu.memory_space<vmem>>, %arg2: memref<8x1xf32, #tpu.memory_space<vmem>>) attributes {dimension_semantics = [#tpu.dimension_semantics<parallel>], iteration_bounds = array<i64: 4>, scalar_prefetch = 0 : i64, scratch_operands = 0 : i64, tpu.core_type = #tpu.core_type<tc>, window_params = [{transform_indices = @transform_0, window_bounds = array<i64: 8, 17>}, {transform_indices = @transform_1, window_bounds = array<i64: 8, 1>}]} {
    %c0 = arith.constant 0 : index
    %c0_0 = arith.constant 0 : index
    %0 = vector.load %arg1[%c0, %c0_0] : memref<8x17xf32, #tpu.memory_space<vmem>>, vector<8x17xf32>
    %1 = tpu.iota {dimensions = array<i32: 1>} : vector<1x17xi32>
    %2 = arith.sitofp %1 : vector<1x17xi32> to vector<1x17xf32>
    %cst = arith.constant dense<0xFF800000> : vector<8xf32>
    %3 = vector.multi_reduction <maximumf>, %0, %cst [1] : vector<8x17xf32> to vector<8xf32>
    %4 = vector.shape_cast %3 : vector<8xf32> to vector<8x1xf32>
    %5 = vector.broadcast %4 : vector<8x1xf32> to vector<8x17xf32>
    %6 = arith.subf %0, %5 : vector<8x17xf32>
    %7 = math.exp %6 : vector<8x17xf32>
    %8 = vector.broadcast %2 : vector<1x17xf32> to vector<8x17xf32>
    %9 = arith.mulf %7, %8 : vector<8x17xf32>
    %cst_1 = arith.constant dense<0.000000e+00> : vector<8xf32>
    %10 = vector.multi_reduction <add>, %9, %cst_1 [1] : vector<8x17xf32> to vector<8xf32>
    %11 = vector.shape_cast %10 : vector<8xf32> to vector<8x1xf32>
    %cst_2 = arith.constant dense<0.000000e+00> : vector<8xf32>
    %12 = vector.multi_reduction <add>, %7, %cst_2 [1] : vector<8x17xf32> to vector<8xf32>
    %13 = vector.shape_cast %12 : vector<8xf32> to vector<8x1xf32>
    %14 = arith.divf %11, %13 : vector<8x1xf32>
    %c0_3 = arith.constant 0 : index
    %c0_4 = arith.constant 0 : index
    %15 = vector.load %arg2[%c0_3, %c0_4] : memref<8x1xf32, #tpu.memory_space<vmem>>, vector<8x1xf32>
    tpu.vector_store %arg2[%c0_3, %c0_4], %14 {strides = array<i32>} : memref<8x1xf32, #tpu.memory_space<vmem>>, vector<8x1xf32>,
    return
  }
  func.func @transform_0(%arg0: i32) -> (i32, i32) {
    %c0_i32 = arith.constant 0 : i32
    %c0_i32_0 = arith.constant 0 : i32
    return %arg0, %c0_i32 : i32, i32
  }
  func.func @transform_1(%arg0: i32) -> (i32, i32) {
    %c0_i32 = arith.constant 0 : i32
    %c0_i32_0 = arith.constant 0 : i32
    return %arg0, %c0_i32 : i32, i32
  }
}

</mosaic_0001>

<llo_original>
// kernel: tpu_custom_call.1
$region0: #{tpu_custom_call.1}
  #allocation0 [shape = 'u32[]', space=smem, size = 0x4, offset = 0x4, fixed_abs, tag = 'smem constant byte address 0x4 - core index']
  #allocation1 [shape = 'u32[72,128]{1,0:T(1,128)}', space=vmem, size = 0x9000, scoped, tag = 'internal scratch']
  %s0 = inlined_call_operand.vmem [shape: f32[32,17], index: 0, kind: input, shape index: {}]
  %s1 = inlined_call_operand.vmem [shape: f32[32,1], index: 1, kind: output, shape index: {}]
  %s2 = sld [smem:[#allocation0]]
  $region37: #{tpu_custom_call.1} parent=0
    _
  %s4 = ssub.s32 1, %s2
  %s5 = scalar_select 0, %s4, %s2
  loop: start=0, step=1, limit=6
  $region2: #{tpu_custom_call.1} parent=0 // loop_pre_header
    _
  $region3: #{tpu_custom_call.1} parent=0 // loop_header
    %s7 = sphi 0, %s11
    %p8 = scmp.ge.s32.totalorder %s7, 6
    %s17 = sphi 0, %s19
    %s20 = sphi 0, %s17
    %s21 = sphi 0, %s20
    %s37 = sphi 0, %s21
    %s43 = sphi 0, %s45
    %s46 = sphi 0, %s43
    %s47 = sphi 0, %s46
    %s63 = sphi 0, %s47
  $region4: #{tpu_custom_call.1} parent=0 // loop_header_branch
    %10 = sbr.rel (%p8) target = $region8
  $region5: #{tpu_custom_call.1} parent=0 // loop_body
    %s12 = ssub.s32 %s7, 1
    %s13 = ssub.s32 %s7, 2
    %s14 = sadd.s32 %s7, 1
    %s15 = ssub.s32 %s7, %s14
    %p16 = scmp.eq.s32.totalorder %s15, 0
    %s18 = sadd.s32 %s17, 1
    %s19 = scalar_select %p16, %s17, %s18
    %p22 = pneg %p16
    %p23 = scmp.eq.s32.totalorder %s7, 3
    %p24 = por %p22, %p23
    %p25 = scmp.ne.s32.totalorder %s17, %s20
    %p26 = scmp.eq.s32.totalorder %s7, 0
    %p27 = por %p25, %p26
    %p28 = scmp.ne.s32.totalorder %s17, %s20
    %p29 = scmp.eq.s32.totalorder %s12, 3
    %p30 = por %p28, %p29
    %p31 = scmp.ne.s32.totalorder %s20, %s21
    %p32 = scmp.eq.s32.totalorder %s12, 0
    %p33 = por %p31, %p32
    %p34 = scmp.ne.s32.totalorder %s20, %s21
    %p35 = scmp.eq.s32.totalorder %s13, 3
    %p36 = por %p34, %p35
    %p38 = scmp.ne.s32.totalorder %s21, %s37
    %p39 = scmp.eq.s32.totalorder %s13, 0
    %p40 = por %p38, %p39
    %s41 = ssub.s32 %s7, %s14
    %p42 = scmp.eq.s32.totalorder %s41, 0
    %s44 = sadd.s32 %s43, 1
    %s45 = scalar_select %p42, %s43, %s44
    %p48 = pneg %p42
    %p49 = scmp.eq.s32.totalorder %s7, 3
    %p50 = por %p48, %p49
    %p51 = scmp.ne.s32.totalorder %s43, %s46
    %p52 = scmp.eq.s32.totalorder %s7, 0
    %p53 = por %p51, %p52
    %p54 = scmp.ne.s32.totalorder %s43, %s46
    %p55 = scmp.eq.s32.totalorder %s12, 3
    %p56 = por %p54, %p55
    %p57 = scmp.ne.s32.totalorder %s46, %s47
    %p58 = scmp.eq.s32.totalorder %s12, 0
    %p59 = por %p57, %p58
    %p60 = scmp.ne.s32.totalorder %s46, %s47
    %p61 = scmp.eq.s32.totalorder %s13, 3
    %p62 = por %p60, %p61
    %p64 = scmp.ne.s32.totalorder %s47, %s63
    %p65 = scmp.eq.s32.totalorder %s13, 0
    %p66 = por %p64, %p65
    %p67 = scmp.le.s32.totalorder 1, %s7
    %p68 = scmp.lt.s32.totalorder %s7, 5
    %p69 = pnand %p67, %p68
    %p70 = pneg %p69
    // Predicated region
    $region9: #{tpu_custom_call.1} parent=5 // pred_check
      _
    $region10: #{tpu_custom_call.1} parent=5 // pred_check_branch
      %72 = sbr.rel (%p69) target = $region12
    $region11: #{tpu_custom_call.1} parent=5 // pred_region
      %s73 = ssub.s32 %s7, 1
    $region12: #{tpu_custom_call.1} parent=5 // pred_fallthru
      _
    %p74 = scmp.lt.s32.totalorder %s7, 4
    // Predicated region
    $region13: #{tpu_custom_call.1} parent=5 // pred_check
      %p75 = pneg %p74
    $region14: #{tpu_custom_call.1} parent=5 // pred_check_branch
      %77 = sbr.rel (%p75) target = $region16
    $region15: #{tpu_custom_call.1} parent=5 // pred_region
      // Predicated region
      $region17: #{tpu_custom_call.1} parent=15 // pred_check
        %p78 = pneg %p27
      $region18: #{tpu_custom_call.1} parent=15 // pred_check_branch
        %80 = sbr.rel (%p78) target = $region20
      $region19: #{tpu_custom_call.1} parent=15 // pred_region
        %p81 = scmp.lt.s32.totalorder %s7, 3
        %s82 = scalar_select %p81, %s7, 3
        %s83 = smul.addr %s82, 8
        %s84 = scalar_lea.vmem %s0, %s83
      $region20: #{tpu_custom_call.1} parent=15 // pred_fallthru
        _
    $region16: #{tpu_custom_call.1} parent=5 // pred_fallthru
      _
    %p85 = scmp.le.s32.totalorder 1, %s7
    %p86 = scmp.lt.s32.totalorder %s7, 5
    %p87 = pnand %p85, %p86
    %p88 = pneg %p87
    // Predicated region
    $region21: #{tpu_custom_call.1} parent=5 // pred_check
      _
    $region22: #{tpu_custom_call.1} parent=5 // pred_check_branch
      %90 = sbr.rel (%p87) target = $region24
    $region23: #{tpu_custom_call.1} parent=5 // pred_region
      %s91 = ssub.s32 %s7, 1
      %p92 = scmp.lt.s32.totalorder %s12, 3
      %s93 = scalar_select %p92, %s12, 3
      %s94 = smul.addr %s93, 8
      %s95 = scalar_lea.vmem %s0, %s94
      %p96 = pneg %p33
      %p97 = pneg %p30
      %p98 = pneg %p59
      %p99 = pneg %p56
      %p100 = scmp.lt.s32.totalorder %s12, 3
      %s101 = scalar_select %p100, %s12, 3
      %s102 = smul.addr %s101, 8
      %s103 = scalar_lea.vmem %s1, %s102
      %p104 = scmp.lt.s32.totalorder %s12, 3
      %s105 = scalar_select %p104, %s12, 3
      %s106 = smul.addr %s105, 8
      %s107 = scalar_lea.vmem %s0, %s106
      %p108 = scmp.lt.s32.totalorder %s12, 3
      %s109 = scalar_select %p108, %s12, 3
      %s110 = smul.addr %s109, 8
      %s111 = scalar_lea.vmem %s1, %s110
      %v112 = vld [vmem:[%s107] sm:$0xff]
      %v113 = vlaneseq
      %v114 = vand.u32 %v113, 127
      %v115 = vcvt.s32.f32 %v114
      %vm116 = vcmask 138240
      %v117 = vsel %vm116, %v112, -inf
      %118 = vmax.xlane.f32.xlu0 %v117
      %v119 = vpop.xlane.xlu0 %118
      %v120 = vsub.f32 %v112, %v119
      %v121 = vmul.f32 %v120, 1.442695
      %v122 = vpow.pop %v121
      %v123 = vmul.f32 %v122, %v115
      %v124 = vsel %vm116, %v123, 0.0
      %125 = vadd.xlane.f32.xlu0 %v124
      %v126 = vpop.xlane.xlu0 %125
      %v127 = vsel %vm116, %v122, 0.0
      %128 = vadd.xlane.f32.xlu0 %v127
      %v129 = vpop.xlane.xlu0 %128
      %v130 = vrcp.pop %v129
      %v131 = vmul.f32 %v129, %v130
      %v132 = vsub.f32 1.0, %v131
      %v133 = vmul.f32 %v130, %v132
      %v134 = vadd.f32 %v130, %v133
      %vm135 = vweird.f32 %v129
      %vm136 = vweird.f32 %v130
      %vm137 = vmor %vm135, %vm136
      %v138 = vsel %vm137, %v130, %v134
      %v139 = vand.u32 2147483647, %v129
      %vm140 = vcmp.eq.f32.partialorder %v139, 8.507059e+37
      %v141 = vand.u32 %v129, 2147483648
      %v142 = vor.u32 1.1754944e-38, %v141
      %v143 = vsel %vm140, %v142, %v138
      %v144 = vmul.f32 %v126, %v143
      %vm145 = vcmask 7168
      %146 = vst.msk [vmem:[%s111] sm:$0xff] %vm145, %v144
      %p147 = scmp.lt.s32.totalorder %s12, 3
      %s148 = scalar_select %p147, %s12, 3
      %s149 = smul.addr %s148, 8
      %s150 = scalar_lea.vmem %s1, %s149
      // Predicated region
      $region25: #{tpu_custom_call.1} parent=23 // pred_check
        %p151 = pneg %p56
      $region26: #{tpu_custom_call.1} parent=23 // pred_check_branch
        %153 = sbr.rel (%p151) target = $region28
      $region27: #{tpu_custom_call.1} parent=23 // pred_region
        _
      $region28: #{tpu_custom_call.1} parent=23 // pred_fallthru
        _
    $region24: #{tpu_custom_call.1} parent=5 // pred_fallthru
      _
    %p154 = scmp.le.s32.totalorder 2, %s7
    // Predicated region
    $region29: #{tpu_custom_call.1} parent=5 // pred_check
      %p155 = pneg %p154
    $region30: #{tpu_custom_call.1} parent=5 // pred_check_branch
      %157 = sbr.rel (%p155) target = $region32
    $region31: #{tpu_custom_call.1} parent=5 // pred_region
      %s158 = ssub.s32 %s7, 2
      // Predicated region
      $region33: #{tpu_custom_call.1} parent=31 // pred_check
        %p159 = pneg %p62
      $region34: #{tpu_custom_call.1} parent=31 // pred_check_branch
        %161 = sbr.rel (%p159) target = $region36
      $region35: #{tpu_custom_call.1} parent=31 // pred_region
        %p162 = scmp.lt.s32.totalorder %s13, 3
        %s163 = scalar_select %p162, %s13, 3
        %s164 = smul.addr %s163, 8
        %s165 = scalar_lea.vmem %s1, %s164
      $region36: #{tpu_custom_call.1} parent=31 // pred_fallthru
        _
    $region32: #{tpu_custom_call.1} parent=5 // pred_fallthru
      _
  $region6: #{tpu_custom_call.1} parent=0 // loop_footer
    %s11 = sadd.s32 1, %s7
  $region7: #{tpu_custom_call.1} parent=0 // loop_footer_branch
    %6 = sbr.rel target = $region3
  $region8: #{tpu_custom_call.1} parent=0 // loop_exit
    _

</llo_original>
